<compile_context>
chip_gen: v5e
topology: v5e:2x2
jax: 0.10.0
libtpu: 0.0.40
codegen_flags: <defaults>
</compile_context>

<pallas_src>
import functools

import jax
import jax.numpy as jnp
from jax import lax
from jax.experimental import pallas as pl
from jax.experimental.pallas import tpu as pltpu

# ---- module hyper-parameters (from the PyTorch source) ----
BLOCK_LENGTH = 10
N_EMB = 100
NUM_HEADS = 4
HEAD_SIZE = 25            # NUM_HEADS * HEAD_SIZE == N_EMB (required by proj_layer)

_LANE = 128
_SUBLANE = 8
_NEG_BIAS = -1e30


def _round_up(v, m):
    return (v + m - 1) // m * m


def mha_kernel(x_ref, wqkv_ref, wp_ref, bp_ref, mask_ref, o_ref, *,
               num_heads, head_pad):
    """One grid step = one batch element.

    x_ref    : (1, TP, CP)        tokens for this batch (compute dtype)
    wqkv_ref : (CP, 3*H*HSP)      fused Q|K|V projection (scale folded into Q)
    wp_ref   : (H*HSP, CP)        output projection (head-concat folded in)
    bp_ref   : (1, CP)            output projection bias (f32)
    mask_ref : (TP, TP)           precomputed additive causal bias (f32)
    o_ref    : (1, TP, CP)        output (f32), lane-dense 128-wide stores
    """
    x = x_ref[0]                                   # (TP, CP)
    cdtype = x.dtype                               # bf16 fast path or f32
    hw = num_heads * head_pad                      # 128

    # --- fused QKV: one lane-dense MXU matmul, f32 accumulation -------------
    qkv = jnp.dot(x, wqkv_ref[...],
                  preferred_element_type=jnp.float32)      # (TP, 3*HW) f32
    q_all = qkv[:, :hw]                                    # (TP, HW)
    k_all = qkv[:, hw:2 * hw]                              # (TP, HW)
    v_all = qkv[:, 2 * hw:]                                # (TP, HW)

    # Single transpose of the K block (one XLU op instead of one per head):
    # per-head score matmuls are then in native MXU orientation.
    kT_all = k_all.T                                       # (HW, TP)

    mask = mask_ref[...]                                   # (TP, TP) f32

    # --- per-head attention core (static lane/sublane slices) ---------------
    av_parts = []
    for h in range(num_heads):
        lo = h * head_pad
        q_h = q_all[:, lo:lo + head_pad].astype(cdtype)    # (TP, HSP)
        kT_h = kT_all[lo:lo + head_pad, :].astype(cdtype)  # (HSP, TP)
        v_h = v_all[:, lo:lo + head_pad].astype(cdtype)    # (TP, HSP)

        s = jnp.dot(q_h, kT_h,
                    preferred_element_type=jnp.float32)    # (TP, TP) f32
        s = s + mask                                       # additive finite bias
        # Softmax (f32, v5e-safe) with deferred normalization.
        s = s - jnp.max(s, axis=-1, keepdims=True)
        p = jnp.exp(s)
        denom = jnp.sum(p, axis=-1, keepdims=True)         # (TP, 1)
        # TODO(synk): training-mode dropout on the attention logits (applied
        # before the mask in the PyTorch reference) is not implemented.
        av = jnp.dot(p.astype(cdtype), v_h,
                     preferred_element_type=jnp.float32)   # (TP, HSP) f32
        # Normalize the small (TP, HSP) output instead of the (TP, TP) probs.
        av = av * pl.reciprocal(denom, approx=(cdtype != jnp.float32))
        av_parts.append(av)

    # Lane-concat per-head outputs into a single (TP, H*HSP = 128) slab.
    av_cat = jnp.concatenate(av_parts, axis=-1)            # (TP, HW) f32

    # --- output projection: one (TP,128)@(128,CP) matmul + bias -------------
    y = jnp.dot(av_cat.astype(cdtype), wp_ref[...],
                preferred_element_type=jnp.float32)        # (TP, CP) f32
    y = y + bp_ref[...]
    # TODO(synk): training-mode dropout after the projection not implemented.
    o_ref[0] = y.astype(o_ref.dtype)


def prepare_params(wq, wk, wv, wp_t, bp, *, compute_dtype=jnp.bfloat16):
    """Repack module parameters once (reuse across forward passes):
      * Q/K/V for all heads fused into one (CP, 3*H*HSP) lane-dense weight,
        1/sqrt(head_size) folded into the Q block.
      * projection weight packed as (H*HSP, CP) so the head-concat is folded
        into a single matmul.
      * bf16 cast for MXU inputs (bf16-native on v5e/v6e/v7x); bias stays f32.
    """
    H, C, hs = wq.shape
    CP = _round_up(C, _LANE)
    HSP = _round_up(hs, _SUBLANE)
    scale = float(hs) ** -0.5      # Head stores head_size as `num_heads`

    def pack_heads(w):             # (H, C, hs) -> (CP, H*HSP)
        wpad = jnp.pad(w, ((0, 0), (0, CP - C), (0, HSP - hs)))
        return jnp.transpose(wpad, (1, 0, 2)).reshape(CP, H * HSP)

    wqkv_p = jnp.concatenate(
        [pack_heads(wq * scale), pack_heads(wk), pack_heads(wv)],
        axis=1).astype(compute_dtype)                       # (CP, 3*H*HSP)

    # proj weight stored transposed as (C_in = H*hs, C_out = C) -> per head,
    # padded, re-flattened so rows line up with the lane-packed av layout.
    wp_h = wp_t.reshape(H, hs, C)
    wp_p = jnp.pad(wp_h, ((0, 0), (0, HSP - hs), (0, CP - C)))
    wp_p = wp_p.reshape(H * HSP, CP).astype(compute_dtype)  # (H*HSP, CP)

    bp_p = jnp.pad(bp, (0, CP - C)).reshape(1, CP).astype(jnp.float32)
    return wqkv_p, wp_p, bp_p


def multi_head_attention(x, params, *, num_heads=NUM_HEADS, head_size=HEAD_SIZE):
    """x: (B, T, C) f32; params from prepare_params(). Returns (B, T, C) f32."""
    wqkv_p, wp_p, bp_p = params
    B, T, C = x.shape
    CP = wqkv_p.shape[0]
    HSP = _round_up(head_size, _SUBLANE)
    HW = num_heads * HSP
    cdtype = wqkv_p.dtype

    TP = _round_up(T, _SUBLANE)
    x_p = jnp.pad(x, ((0, 0), (0, TP - T), (0, CP - C))).astype(cdtype)

    # Precompute the additive causal bias once (hoisted out of the kernel):
    # padded key columns (col >= T) are always masked off.
    row = lax.broadcasted_iota(jnp.int32, (TP, TP), 0)
    col = lax.broadcasted_iota(jnp.int32, (TP, TP), 1)
    keep = jnp.logical_and(row >= col, col < T)
    mask = jnp.where(keep, 0.0, _NEG_BIAS).astype(jnp.float32)

    out = pl.pallas_call(
        functools.partial(mha_kernel, num_heads=num_heads, head_pad=HSP),
        out_shape=jax.ShapeDtypeStruct((B, TP, CP), jnp.float32),
        grid_spec=pltpu.PrefetchScalarGridSpec(
            num_scalar_prefetch=0,
            grid=(B,),
            in_specs=[
                pl.BlockSpec((1, TP, CP), lambda b: (b, 0, 0)),   # x (this batch)
                pl.BlockSpec((CP, 3 * HW), lambda b: (0, 0)),     # fused QKV (resident)
                pl.BlockSpec((HW, CP), lambda b: (0, 0)),         # output proj (resident)
                pl.BlockSpec((1, CP), lambda b: (0, 0)),          # proj bias (resident)
                pl.BlockSpec((TP, TP), lambda b: (0, 0)),         # causal bias (resident)
            ],
            out_specs=pl.BlockSpec((1, TP, CP), lambda b: (b, 0, 0)),
        ),
        compiler_params=pltpu.CompilerParams(
            dimension_semantics=("parallel",)),                   # v7x megacore
    )(x_p, wqkv_p, wp_p, bp_p, mask)

    return out[:, :T, :C]


def reference_mha(x, wq, wk, wv, wp_t, bp):
    """Pure-JAX f32 reference mirroring the PyTorch forward (eval mode)."""
    H, C, hs = wq.shape
    T = x.shape[1]
    scale = float(hs) ** -0.5
    tril = jnp.tril(jnp.ones((BLOCK_LENGTH, BLOCK_LENGTH), jnp.float32))[:T, :T]
    outs = []
    for h in range(H):
        q = x @ wq[h]
        k = x @ wk[h]
        v = x @ wv[h]
        wei = (q @ jnp.swapaxes(k, -2, -1)) * scale
        wei = jnp.where(tril == 0.0, -jnp.inf, wei)
        wei = jax.nn.softmax(wei, axis=-1)
        outs.append(wei @ v)
    cat = jnp.concatenate(outs, axis=-1)
    return cat @ wp_t + bp


if __name__ == "__main__":
    B, T, C = 2, 8, N_EMB          # T <= block_length (10)
    key = jax.random.PRNGKey(0)
    kx, kq, kk, kv, kp, kb = jax.random.split(key, 6)

    x = jax.random.normal(kx, (B, T, C), dtype=jnp.float32)

    # Per-head Linear(n_emb, head_size, bias=False): torch weight (hs, C);
    # stored here pre-transposed as (H, C, hs) so the math is x @ W.
    wq = 0.05 * jax.random.normal(kq, (NUM_HEADS, C, HEAD_SIZE), dtype=jnp.float32)
    wk = 0.05 * jax.random.normal(kk, (NUM_HEADS, C, HEAD_SIZE), dtype=jnp.float32)
    wv = 0.05 * jax.random.normal(kv, (NUM_HEADS, C, HEAD_SIZE), dtype=jnp.float32)
    # proj_layer: Linear(n_emb, n_emb) — stored transposed (in, out) = (C, C).
    wp_t = 0.05 * jax.random.normal(kp, (C, C), dtype=jnp.float32)
    bp = 0.05 * jax.random.normal(kb, (C,), dtype=jnp.float32)

    ref = reference_mha(x, wq, wk, wv, wp_t, bp)

    # 1) f32 path: validates the restructured kernel against the reference.
    params_f32 = prepare_params(wq, wk, wv, wp_t, bp, compute_dtype=jnp.float32)
    out_f32 = jax.block_until_ready(multi_head_attention(x, params_f32))
    assert out_f32.shape == (B, T, C)
    assert jnp.allclose(out_f32, ref, atol=2e-4, rtol=2e-4), "f32 kernel mismatch"

    # 2) bf16 MXU-input fast path (preferred on v5e/v6e/v7x): f32 accumulation,
    #    f32 softmax.  Note: approx reciprocal means softmax rows sum to 1 only
    #    to ~1e-3 relative — fine for inference, document if fed to training.
    params_bf16 = prepare_params(wq, wk, wv, wp_t, bp, compute_dtype=jnp.bfloat16)
    out_bf16 = jax.block_until_ready(multi_head_attention(x, params_bf16))
    assert out_bf16.shape == (B, T, C)
    assert jnp.allclose(out_bf16, ref, atol=3e-2, rtol=3e-2), "bf16 kernel mismatch"

    print("KERNEL_OK")
</pallas_src>

<mosaic_0001>
module attributes {stable_mosaic.version = 11 : i64} {
  func.func @mha_kernel(%arg0: i32, %arg1: memref<1x8x128xf32, #tpu.memory_space<vmem>>, %arg2: memref<128x384xf32, #tpu.memory_space<vmem>>, %arg3: memref<128x128xf32, #tpu.memory_space<vmem>>, %arg4: memref<1x128xf32, #tpu.memory_space<vmem>>, %arg5: memref<8x8xf32, #tpu.memory_space<vmem>>, %arg6: memref<1x8x128xf32, #tpu.memory_space<vmem>>) attributes {dimension_semantics = [#tpu.dimension_semantics<parallel>], iteration_bounds = array<i64: 2>, scalar_prefetch = 0 : i64, scratch_operands = 0 : i64, tpu.core_type = #tpu.core_type<tc>, window_params = [{transform_indices = @transform_0, window_bounds = array<i64: 1, 8, 128>}, {pipeline_mode = #tpu.pipeline_mode<synchronous>, transform_indices = @transform_1, window_bounds = array<i64: 128, 384>}, {pipeline_mode = #tpu.pipeline_mode<synchronous>, transform_indices = @transform_2, window_bounds = array<i64: 128, 128>}, {pipeline_mode = #tpu.pipeline_mode<synchronous>, transform_indices = @transform_3, window_bounds = array<i64: 1, 128>}, {pipeline_mode = #tpu.pipeline_mode<synchronous>, transform_indices = @transform_4, window_bounds = array<i64: 8, 8>}, {transform_indices = @transform_5, window_bounds = array<i64: 1, 8, 128>}]} {
    %c0 = arith.constant 0 : index
    %c0_0 = arith.constant 0 : index
    %c0_1 = arith.constant 0 : index
    %0 = vector.load %arg1[%c0, %c0_0, %c0_1] : memref<1x8x128xf32, #tpu.memory_space<vmem>>, vector<1x8x128xf32>
    %1 = vector.shape_cast %0 : vector<1x8x128xf32> to vector<8x128xf32>
    %c0_2 = arith.constant 0 : index
    %c0_3 = arith.constant 0 : index
    %2 = vector.load %arg2[%c0_2, %c0_3] : memref<128x384xf32, #tpu.memory_space<vmem>>, vector<128x384xf32>
    %cst = arith.constant dense<0.000000e+00> : vector<8x384xf32>
    %3 = tpu.matmul %1, %2, %cst {dimension_numbers = #tpu.dot_dimension_numbers<[1], [0], [0], [1], [0, 0, 1, 1], [], []>} : vector<8x128xf32>, vector<128x384xf32>, vector<8x384xf32> -> vector<8x384xf32>
    %4 = vector.extract_strided_slice %3 {offsets = [0, 0], sizes = [8, 128], strides = [1, 1]} : vector<8x384xf32> to vector<8x128xf32>
    %5 = vector.extract_strided_slice %3 {offsets = [0, 128], sizes = [8, 128], strides = [1, 1]} : vector<8x384xf32> to vector<8x128xf32>
    %6 = vector.extract_strided_slice %3 {offsets = [0, 256], sizes = [8, 128], strides = [1, 1]} : vector<8x384xf32> to vector<8x128xf32>
    %7 = tpu.transpose %5, [1, 0] : vector<8x128xf32> -> vector<128x8xf32>
    %c0_4 = arith.constant 0 : index
    %c0_5 = arith.constant 0 : index
    %8 = vector.load %arg5[%c0_4, %c0_5] : memref<8x8xf32, #tpu.memory_space<vmem>>, vector<8x8xf32>
    %9 = vector.extract_strided_slice %4 {offsets = [0, 0], sizes = [8, 32], strides = [1, 1]} : vector<8x128xf32> to vector<8x32xf32>
    %10 = vector.extract_strided_slice %7 {offsets = [0, 0], sizes = [32, 8], strides = [1, 1]} : vector<128x8xf32> to vector<32x8xf32>
    %11 = vector.extract_strided_slice %6 {offsets = [0, 0], sizes = [8, 32], strides = [1, 1]} : vector<8x128xf32> to vector<8x32xf32>
    %cst_6 = arith.constant dense<0.000000e+00> : vector<8x8xf32>
    %12 = tpu.matmul %9, %10, %cst_6 {dimension_numbers = #tpu.dot_dimension_numbers<[1], [0], [0], [1], [0, 0, 1, 1], [], []>} : vector<8x32xf32>, vector<32x8xf32>, vector<8x8xf32> -> vector<8x8xf32>
    %13 = arith.addf %12, %8 : vector<8x8xf32>
    %cst_7 = arith.constant dense<0xFF800000> : vector<8xf32>
    %14 = vector.multi_reduction <maximumf>, %13, %cst_7 [1] : vector<8x8xf32> to vector<8xf32>
    %15 = vector.shape_cast %14 : vector<8xf32> to vector<8x1xf32>
    %16 = vector.broadcast %15 : vector<8x1xf32> to vector<8x8xf32>
    %17 = arith.subf %13, %16 : vector<8x8xf32>
    %18 = math.exp %17 : vector<8x8xf32>
    %cst_8 = arith.constant dense<0.000000e+00> : vector<8xf32>
    %19 = vector.multi_reduction <add>, %18, %cst_8 [1] : vector<8x8xf32> to vector<8xf32>
    %20 = vector.shape_cast %19 : vector<8xf32> to vector<8x1xf32>
    %cst_9 = arith.constant dense<0.000000e+00> : vector<8x32xf32>
    %21 = tpu.matmul %18, %11, %cst_9 {dimension_numbers = #tpu.dot_dimension_numbers<[1], [0], [0], [1], [0, 0, 1, 1], [], []>} : vector<8x8xf32>, vector<8x32xf32>, vector<8x32xf32> -> vector<8x32xf32>
    %22 = tpu.reciprocal %20 : vector<8x1xf32> -> vector<8x1xf32>
    %23 = vector.broadcast %22 : vector<8x1xf32> to vector<8x32xf32>
    %24 = arith.mulf %21, %23 : vector<8x32xf32>
    %25 = vector.extract_strided_slice %4 {offsets = [0, 32], sizes = [8, 32], strides = [1, 1]} : vector<8x128xf32> to vector<8x32xf32>
    %26 = vector.extract_strided_slice %7 {offsets = [32, 0], sizes = [32, 8], strides = [1, 1]} : vector<128x8xf32> to vector<32x8xf32>
    %27 = vector.extract_strided_slice %6 {offsets = [0, 32], sizes = [8, 32], strides = [1, 1]} : vector<8x128xf32> to vector<8x32xf32>
    %cst_10 = arith.constant dense<0.000000e+00> : vector<8x8xf32>
    %28 = tpu.matmul %25, %26, %cst_10 {dimension_numbers = #tpu.dot_dimension_numbers<[1], [0], [0], [1], [0, 0, 1, 1], [], []>} : vector<8x32xf32>, vector<32x8xf32>, vector<8x8xf32> -> vector<8x8xf32>
    %29 = arith.addf %28, %8 : vector<8x8xf32>
    %cst_11 = arith.constant dense<0xFF800000> : vector<8xf32>
    %30 = vector.multi_reduction <maximumf>, %29, %cst_11 [1] : vector<8x8xf32> to vector<8xf32>
    %31 = vector.shape_cast %30 : vector<8xf32> to vector<8x1xf32>
    %32 = vector.broadcast %31 : vector<8x1xf32> to vector<8x8xf32>
    %33 = arith.subf %29, %32 : vector<8x8xf32>
    %34 = math.exp %33 : vector<8x8xf32>
    %cst_12 = arith.constant dense<0.000000e+00> : vector<8xf32>
    %35 = vector.multi_reduction <add>, %34, %cst_12 [1] : vector<8x8xf32> to vector<8xf32>
    %36 = vector.shape_cast %35 : vector<8xf32> to vector<8x1xf32>
    %cst_13 = arith.constant dense<0.000000e+00> : vector<8x32xf32>
    %37 = tpu.matmul %34, %27, %cst_13 {dimension_numbers = #tpu.dot_dimension_numbers<[1], [0], [0], [1], [0, 0, 1, 1], [], []>} : vector<8x8xf32>, vector<8x32xf32>, vector<8x32xf32> -> vector<8x32xf32>
    %38 = tpu.reciprocal %36 : vector<8x1xf32> -> vector<8x1xf32>
    %39 = vector.broadcast %38 : vector<8x1xf32> to vector<8x32xf32>
    %40 = arith.mulf %37, %39 : vector<8x32xf32>
    %41 = vector.extract_strided_slice %4 {offsets = [0, 64], sizes = [8, 32], strides = [1, 1]} : vector<8x128xf32> to vector<8x32xf32>
    %42 = vector.extract_strided_slice %7 {offsets = [64, 0], sizes = [32, 8], strides = [1, 1]} : vector<128x8xf32> to vector<32x8xf32>
    %43 = vector.extract_strided_slice %6 {offsets = [0, 64], sizes = [8, 32], strides = [1, 1]} : vector<8x128xf32> to vector<8x32xf32>
    %cst_14 = arith.constant dense<0.000000e+00> : vector<8x8xf32>
    %44 = tpu.matmul %41, %42, %cst_14 {dimension_numbers = #tpu.dot_dimension_numbers<[1], [0], [0], [1], [0, 0, 1, 1], [], []>} : vector<8x32xf32>, vector<32x8xf32>, vector<8x8xf32> -> vector<8x8xf32>
    %45 = arith.addf %44, %8 : vector<8x8xf32>
    %cst_15 = arith.constant dense<0xFF800000> : vector<8xf32>
    %46 = vector.multi_reduction <maximumf>, %45, %cst_15 [1] : vector<8x8xf32> to vector<8xf32>
    %47 = vector.shape_cast %46 : vector<8xf32> to vector<8x1xf32>
    %48 = vector.broadcast %47 : vector<8x1xf32> to vector<8x8xf32>
    %49 = arith.subf %45, %48 : vector<8x8xf32>
    %50 = math.exp %49 : vector<8x8xf32>
    %cst_16 = arith.constant dense<0.000000e+00> : vector<8xf32>
    %51 = vector.multi_reduction <add>, %50, %cst_16 [1] : vector<8x8xf32> to vector<8xf32>
    %52 = vector.shape_cast %51 : vector<8xf32> to vector<8x1xf32>
    %cst_17 = arith.constant dense<0.000000e+00> : vector<8x32xf32>
    %53 = tpu.matmul %50, %43, %cst_17 {dimension_numbers = #tpu.dot_dimension_numbers<[1], [0], [0], [1], [0, 0, 1, 1], [], []>} : vector<8x8xf32>, vector<8x32xf32>, vector<8x32xf32> -> vector<8x32xf32>
    %54 = tpu.reciprocal %52 : vector<8x1xf32> -> vector<8x1xf32>
    %55 = vector.broadcast %54 : vector<8x1xf32> to vector<8x32xf32>
    %56 = arith.mulf %53, %55 : vector<8x32xf32>
    %57 = vector.extract_strided_slice %4 {offsets = [0, 96], sizes = [8, 32], strides = [1, 1]} : vector<8x128xf32> to vector<8x32xf32>
    %58 = vector.extract_strided_slice %7 {offsets = [96, 0], sizes = [32, 8], strides = [1, 1]} : vector<128x8xf32> to vector<32x8xf32>
    %59 = vector.extract_strided_slice %6 {offsets = [0, 96], sizes = [8, 32], strides = [1, 1]} : vector<8x128xf32> to vector<8x32xf32>
    %cst_18 = arith.constant dense<0.000000e+00> : vector<8x8xf32>
    %60 = tpu.matmul %57, %58, %cst_18 {dimension_numbers = #tpu.dot_dimension_numbers<[1], [0], [0], [1], [0, 0, 1, 1], [], []>} : vector<8x32xf32>, vector<32x8xf32>, vector<8x8xf32> -> vector<8x8xf32>
    %61 = arith.addf %60, %8 : vector<8x8xf32>
    %cst_19 = arith.constant dense<0xFF800000> : vector<8xf32>
    %62 = vector.multi_reduction <maximumf>, %61, %cst_19 [1] : vector<8x8xf32> to vector<8xf32>
    %63 = vector.shape_cast %62 : vector<8xf32> to vector<8x1xf32>
    %64 = vector.broadcast %63 : vector<8x1xf32> to vector<8x8xf32>
    %65 = arith.subf %61, %64 : vector<8x8xf32>
    %66 = math.exp %65 : vector<8x8xf32>
    %cst_20 = arith.constant dense<0.000000e+00> : vector<8xf32>
    %67 = vector.multi_reduction <add>, %66, %cst_20 [1] : vector<8x8xf32> to vector<8xf32>
    %68 = vector.shape_cast %67 : vector<8xf32> to vector<8x1xf32>
    %cst_21 = arith.constant dense<0.000000e+00> : vector<8x32xf32>
    %69 = tpu.matmul %66, %59, %cst_21 {dimension_numbers = #tpu.dot_dimension_numbers<[1], [0], [0], [1], [0, 0, 1, 1], [], []>} : vector<8x8xf32>, vector<8x32xf32>, vector<8x32xf32> -> vector<8x32xf32>
    %70 = tpu.reciprocal %68 : vector<8x1xf32> -> vector<8x1xf32>
    %71 = vector.broadcast %70 : vector<8x1xf32> to vector<8x32xf32>
    %72 = arith.mulf %69, %71 : vector<8x32xf32>
    %73 = tpu.concatenate %24, %40, %56, %72 in 1 : vector<8x32xf32>, vector<8x32xf32>, vector<8x32xf32>, vector<8x32xf32> -> vector<8x128xf32>
    %c0_22 = arith.constant 0 : index
    %c0_23 = arith.constant 0 : index
    %74 = vector.load %arg3[%c0_22, %c0_23] : memref<128x128xf32, #tpu.memory_space<vmem>>, vector<128x128xf32>
    %cst_24 = arith.constant dense<0.000000e+00> : vector<8x128xf32>
    %75 = tpu.matmul %73, %74, %cst_24 {dimension_numbers = #tpu.dot_dimension_numbers<[1], [0], [0], [1], [0, 0, 1, 1], [], []>} : vector<8x128xf32>, vector<128x128xf32>, vector<8x128xf32> -> vector<8x128xf32>
    %c0_25 = arith.constant 0 : index
    %c0_26 = arith.constant 0 : index
    %76 = vector.load %arg4[%c0_25, %c0_26] : memref<1x128xf32, #tpu.memory_space<vmem>>, vector<1x128xf32>
    %77 = vector.broadcast %76 : vector<1x128xf32> to vector<8x128xf32>
    %78 = arith.addf %75, %77 : vector<8x128xf32>
    %c0_27 = arith.constant 0 : index
    %c0_28 = arith.constant 0 : index
    %c0_29 = arith.constant 0 : index
    %79 = vector.load %arg6[%c0_27, %c0_28, %c0_29] : memref<1x8x128xf32, #tpu.memory_space<vmem>>, vector<1x8x128xf32>
    %80 = vector.shape_cast %79 : vector<1x8x128xf32> to vector<8x128xf32>
    %81 = vector.shape_cast %78 : vector<8x128xf32> to vector<1x8x128xf32>
    tpu.vector_store %arg6[%c0_27, %c0_28, %c0_29], %81 {strides = array<i32>} : memref<1x8x128xf32, #tpu.memory_space<vmem>>, vector<1x8x128xf32>,
    return
  }
  func.func @transform_0(%arg0: i32) -> (i32, i32, i32) {
    %c0_i32 = arith.constant 0 : i32
    %c0_i32_0 = arith.constant 0 : i32
    %c0_i32_1 = arith.constant 0 : i32
    return %arg0, %c0_i32, %c0_i32_0 : i32, i32, i32
  }
  func.func @transform_1(%arg0: i32) -> (i32, i32) {
    %c0_i32 = arith.constant 0 : i32
    %c0_i32_0 = arith.constant 0 : i32
    %c0_i32_1 = arith.constant 0 : i32
    return %c0_i32, %c0_i32_0 : i32, i32
  }
  func.func @transform_2(%arg0: i32) -> (i32, i32) {
    %c0_i32 = arith.constant 0 : i32
    %c0_i32_0 = arith.constant 0 : i32
    %c0_i32_1 = arith.constant 0 : i32
    return %c0_i32, %c0_i32_0 : i32, i32
  }
  func.func @transform_3(%arg0: i32) -> (i32, i32) {
    %c0_i32 = arith.constant 0 : i32
    %c0_i32_0 = arith.constant 0 : i32
    %c0_i32_1 = arith.constant 0 : i32
    return %c0_i32, %c0_i32_0 : i32, i32
  }
  func.func @transform_4(%arg0: i32) -> (i32, i32) {
    %c0_i32 = arith.constant 0 : i32
    %c0_i32_0 = arith.constant 0 : i32
    %c0_i32_1 = arith.constant 0 : i32
    return %c0_i32, %c0_i32_0 : i32, i32
  }
  func.func @transform_5(%arg0: i32) -> (i32, i32, i32) {
    %c0_i32 = arith.constant 0 : i32
    %c0_i32_0 = arith.constant 0 : i32
    %c0_i32_1 = arith.constant 0 : i32
    return %arg0, %c0_i32, %c0_i32_0 : i32, i32, i32
  }
}

</mosaic_0001>

<llo_original>
// kernel: tpu_custom_call.1
$region0: #{tpu_custom_call.1}
  #allocation0 [shape = 'u32[]', space=smem, size = 0x4, offset = 0x4, fixed_abs, tag = 'smem constant byte address 0x4 - core index']
  #allocation1 [shape = 'u32[72,128]{1,0:T(1,128)}', space=vmem, size = 0x9000, scoped, tag = 'internal scratch']
  %s0 = inlined_call_operand.hbm [shape: f32[2,8,128], index: 0, kind: input, shape index: {}]
  %s1 = inlined_call_operand.hbm [shape: f32[128,384], index: 1, kind: input, shape index: {}]
  %s2 = inlined_call_operand.hbm [shape: f32[128,128], index: 2, kind: input, shape index: {}]
  %s3 = inlined_call_operand.vmem [shape: f32[1,128], index: 3, kind: input, shape index: {}]
  %s4 = inlined_call_operand.hbm [shape: f32[8,8], index: 4, kind: input, shape index: {}]
  %s5 = inlined_call_operand.hbm [shape: f32[2,8,128], index: 5, kind: output, shape index: {}]
  %s6 = sld [smem:[#allocation0]]
  $region69: #{tpu_custom_call.1} parent=0
    _
  %s8 = ssub.s32 1, %s6
  %s9 = scalar_select 0, %s8, %s6
  $region1: #{tpu_custom_call.1} parent=0
    #allocation2 [shape = 'u8[8192]{0}', space=vmem, size = 0x2000, scoped, tag = 'input window, operand 0']
    #allocation3 [shape = 's32[2]{0}', space=sflag, size = 0x8, scoped, tag = 'scoped memory for tpu_custom_call.1']
    #allocation4 [shape = 's32[2]{0}', space=sflag, size = 0x8, scoped, tag = 'scoped memory for tpu_custom_call.1']
    #allocation5 [shape = 'u8[196608]{0}', space=vmem, size = 0x30000, scoped, tag = 'input window, operand 1, single buffered']
    #allocation6 [shape = 's32[1]{0}', space=sflag, size = 0x4, scoped, tag = 'scoped memory for tpu_custom_call.1']
    #allocation7 [shape = 'u8[65536]{0}', space=vmem, size = 0x10000, scoped, tag = 'input window, operand 2, single buffered']
    #allocation8 [shape = 'u8[4096]{0}', space=vmem, size = 0x1000, scoped, tag = 'input window, operand 4, single buffered']
    #allocation9 [shape = 's32[1]{0}', space=sflag, size = 0x4, scoped, tag = 'scoped memory for tpu_custom_call.1']
    #allocation10 [shape = 'u8[8192]{0}', space=vmem, size = 0x2000, scoped, tag = 'output window, operand 0']
    %10 = vsyncpa [#allocation3], 0
    %s11 = scalar_lea.sflag [#allocation3], 1
    %12 = vsyncpa %s11, 0
    %13 = vsyncpa [#allocation6], 0
    %14 = vsyncpa [#allocation9], 0
    %15 = vsyncpa [#allocation4], 0
    %s16 = scalar_lea.sflag [#allocation4], 1
    %17 = vsyncpa %s16, 0
    loop: start=0, step=1, limit=4
    $region2: #{tpu_custom_call.1} parent=1 // loop_pre_header
      _
    $region3: #{tpu_custom_call.1} parent=1 // loop_header
      %s19 = sphi 0, %s23
      %p20 = scmp.ge.s32.totalorder %s19, 4
      %s29 = sphi 0, %s31
      %s32 = sphi 0, %s29
      %s33 = sphi 0, %s32
      %s49 = sphi 0, %s33
      %s53 = sphi 0, %s53
      %s55 = sphi 0, %s53
      %s56 = sphi 0, %s55
      %s70 = sphi 0, %s56
      %s74 = sphi 0, %s74
      %s76 = sphi 0, %s74
      %s77 = sphi 0, %s76
      %s91 = sphi 0, %s77
      %s95 = sphi 0, %s95
      %s97 = sphi 0, %s95
      %s98 = sphi 0, %s97
      %s112 = sphi 0, %s98
      %s116 = sphi 0, %s116
      %s118 = sphi 0, %s116
      %s119 = sphi 0, %s118
      %s133 = sphi 0, %s119
      %s139 = sphi 0, %s141
      %s142 = sphi 0, %s139
      %s143 = sphi 0, %s142
      %s159 = sphi 0, %s143
    $region4: #{tpu_custom_call.1} parent=1 // loop_header_branch
      %22 = sbr.rel (%p20) target = $region8
    $region5: #{tpu_custom_call.1} parent=1 // loop_body
      %s24 = ssub.s32 %s19, 1
      %s25 = ssub.s32 %s19, 2
      %s26 = sadd.s32 %s19, 1
      %s27 = ssub.s32 %s19, %s26
      %p28 = scmp.eq.s32.totalorder %s27, 0
      %s30 = sadd.s32 %s29, 1
      %s31 = scalar_select %p28, %s29, %s30
      %p34 = pneg %p28
      %p35 = scmp.eq.s32.totalorder %s19, 1
      %p36 = por %p34, %p35
      %p37 = scmp.ne.s32.totalorder %s29, %s32
      %p38 = scmp.eq.s32.totalorder %s19, 0
      %p39 = por %p37, %p38
      %p40 = scmp.ne.s32.totalorder %s29, %s32
      %p41 = scmp.eq.s32.totalorder %s24, 1
      %p42 = por %p40, %p41
      %p43 = scmp.ne.s32.totalorder %s32, %s33
      %p44 = scmp.eq.s32.totalorder %s24, 0
      %p45 = por %p43, %p44
      %p46 = scmp.ne.s32.totalorder %s32, %s33
      %p47 = scmp.eq.s32.totalorder %s25, 1
      %p48 = por %p46, %p47
      %p50 = scmp.ne.s32.totalorder %s33, %s49
      %p51 = scmp.eq.s32.totalorder %s25, 0
      %p52 = por %p50, %p51
      %s54 = sadd.s32 %s53, 1
      %p57 = scmp.eq.s32.totalorder %s19, 1
      %p58 = scmp.ne.s32.totalorder %s53, %s55
      %p59 = scmp.eq.s32.totalorder %s19, 0
      %p60 = por %p58, %p59
      %p61 = scmp.ne.s32.totalorder %s53, %s55
      %p62 = scmp.eq.s32.totalorder %s24, 1
      %p63 = por %p61, %p62
      %p64 = scmp.ne.s32.totalorder %s55, %s56
      %p65 = scmp.eq.s32.totalorder %s24, 0
      %p66 = por %p64, %p65
      %p67 = scmp.ne.s32.totalorder %s55, %s56
      %p68 = scmp.eq.s32.totalorder %s25, 1
      %p69 = por %p67, %p68
      %p71 = scmp.ne.s32.totalorder %s56, %s70
      %p72 = scmp.eq.s32.totalorder %s25, 0
      %p73 = por %p71, %p72
      %s75 = sadd.s32 %s74, 1
      %p78 = scmp.eq.s32.totalorder %s19, 1
      %p79 = scmp.ne.s32.totalorder %s74, %s76
      %p80 = scmp.eq.s32.totalorder %s19, 0
      %p81 = por %p79, %p80
      %p82 = scmp.ne.s32.totalorder %s74, %s76
      %p83 = scmp.eq.s32.totalorder %s24, 1
      %p84 = por %p82, %p83
      %p85 = scmp.ne.s32.totalorder %s76, %s77
      %p86 = scmp.eq.s32.totalorder %s24, 0
      %p87 = por %p85, %p86
      %p88 = scmp.ne.s32.totalorder %s76, %s77
      %p89 = scmp.eq.s32.totalorder %s25, 1
      %p90 = por %p88, %p89
      %p92 = scmp.ne.s32.totalorder %s77, %s91
      %p93 = scmp.eq.s32.totalorder %s25, 0
      %p94 = por %p92, %p93
      %s96 = sadd.s32 %s95, 1
      %p99 = scmp.eq.s32.totalorder %s19, 1
      %p100 = scmp.ne.s32.totalorder %s95, %s97
      %p101 = scmp.eq.s32.totalorder %s19, 0
      %p102 = por %p100, %p101
      %p103 = scmp.ne.s32.totalorder %s95, %s97
      %p104 = scmp.eq.s32.totalorder %s24, 1
      %p105 = por %p103, %p104
      %p106 = scmp.ne.s32.totalorder %s97, %s98
      %p107 = scmp.eq.s32.totalorder %s24, 0
      %p108 = por %p106, %p107
      %p109 = scmp.ne.s32.totalorder %s97, %s98
      %p110 = scmp.eq.s32.totalorder %s25, 1
      %p111 = por %p109, %p110
      %p113 = scmp.ne.s32.totalorder %s98, %s112
      %p114 = scmp.eq.s32.totalorder %s25, 0
      %p115 = por %p113, %p114
      %s117 = sadd.s32 %s116, 1
      %p120 = scmp.eq.s32.totalorder %s19, 1
      %p121 = scmp.ne.s32.totalorder %s116, %s118
      %p122 = scmp.eq.s32.totalorder %s19, 0
      %p123 = por %p121, %p122
      %p124 = scmp.ne.s32.totalorder %s116, %s118
      %p125 = scmp.eq.s32.totalorder %s24, 1
      %p126 = por %p124, %p125
      %p127 = scmp.ne.s32.totalorder %s118, %s119
      %p128 = scmp.eq.s32.totalorder %s24, 0
      %p129 = por %p127, %p128
      %p130 = scmp.ne.s32.totalorder %s118, %s119
      %p131 = scmp.eq.s32.totalorder %s25, 1
      %p132 = por %p130, %p131
      %p134 = scmp.ne.s32.totalorder %s119, %s133
      %p135 = scmp.eq.s32.totalorder %s25, 0
      %p136 = por %p134, %p135
      %s137 = ssub.s32 %s19, %s26
      %p138 = scmp.eq.s32.totalorder %s137, 0
      %s140 = sadd.s32 %s139, 1
      %s141 = scalar_select %p138, %s139, %s140
      %p144 = pneg %p138
      %p145 = scmp.eq.s32.totalorder %s19, 1
      %p146 = por %p144, %p145
      %p147 = scmp.ne.s32.totalorder %s139, %s142
      %p148 = scmp.eq.s32.totalorder %s19, 0
      %p149 = por %p147, %p148
      %p150 = scmp.ne.s32.totalorder %s139, %s142
      %p151 = scmp.eq.s32.totalorder %s24, 1
      %p152 = por %p150, %p151
      %p153 = scmp.ne.s32.totalorder %s142, %s143
      %p154 = scmp.eq.s32.totalorder %s24, 0
      %p155 = por %p153, %p154
      %p156 = scmp.ne.s32.totalorder %s142, %s143
      %p157 = scmp.eq.s32.totalorder %s25, 1
      %p158 = por %p156, %p157
      %p160 = scmp.ne.s32.totalorder %s143, %s159
      %p161 = scmp.eq.s32.totalorder %s25, 0
      %p162 = por %p160, %p161
      %p163 = scmp.le.s32.totalorder 1, %s19
      %p164 = scmp.lt.s32.totalorder %s19, 3
      %p165 = pnand %p163, %p164
      %p166 = pneg %p165
      // Predicated region
      $region9: #{tpu_custom_call.1} parent=5 // pred_check
        _
      $region10: #{tpu_custom_call.1} parent=5 // pred_check_branch
        %168 = sbr.rel (%p165) target = $region12
      $region11: #{tpu_custom_call.1} parent=5 // pred_region
        %s169 = ssub.s32 %s19, 1
        // Predicated region
        $region13: #{tpu_custom_call.1} parent=11 // pred_check
          %p170 = pneg %p66
        $region14: #{tpu_custom_call.1} parent=11 // pred_check_branch
          %172 = sbr.rel (%p170) target = $region16
        $region15: #{tpu_custom_call.1} parent=11 // pred_region
          %174 = vsyncadd [#allocation6], 0
          %s175 = sshll.u32 %s1, 4
          %s176 = int_to_ptr.hbm [resolvable:$true] %s175
          %s177 = sshll.u32 [#allocation5], 4
          %s178 = int_to_ptr.vmem [resolvable:$true] %s177
          %183 = dma.hbm_to_vmem [thread:$0]  %s176, 6144, %s178, [#allocation6], 384, 384, 24
        $region16: #{tpu_custom_call.1} parent=11 // pred_fallthru
          _
        // Predicated region
        $region17: #{tpu_custom_call.1} parent=11 // pred_check
          %p184 = pneg %p87
        $region18: #{tpu_custom_call.1} parent=11 // pred_check_branch
          %186 = sbr.rel (%p184) target = $region20
        $region19: #{tpu_custom_call.1} parent=11 // pred_region
          %188 = vsyncadd [#allocation6], 0
          %s189 = sshll.u32 %s2, 4
          %s190 = int_to_ptr.hbm [resolvable:$true] %s189
          %s191 = sshll.u32 [#allocation7], 4
          %s192 = int_to_ptr.vmem [resolvable:$true] %s191
          %197 = dma.hbm_to_vmem [thread:$0]  %s190, 2048, %s192, [#allocation6], 128, 128, 8
        $region20: #{tpu_custom_call.1} parent=11 // pred_fallthru
          _
        // Predicated region
        $region21: #{tpu_custom_call.1} parent=11 // pred_check
          %p198 = pneg %p108
        $region22: #{tpu_custom_call.1} parent=11 // pred_check_branch
          %200 = sbr.rel (%p198) target = $region24
        $region23: #{tpu_custom_call.1} parent=11 // pred_region
          _
        $region24: #{tpu_custom_call.1} parent=11 // pred_fallthru
          _
        // Predicated region
        $region25: #{tpu_custom_call.1} parent=11 // pred_check
          %p201 = pneg %p129
        $region26: #{tpu_custom_call.1} parent=11 // pred_check_branch
          %203 = sbr.rel (%p201) target = $region28
        $region27: #{tpu_custom_call.1} parent=11 // pred_region
          %205 = vsyncadd [#allocation9], 0
          %s207 = sshll.u32 %s4, 4
          %s208 = int_to_ptr.hbm [resolvable:$true] %s207
          %s209 = sshll.u32 [#allocation8], 4
          %s210 = int_to_ptr.vmem [resolvable:$true] %s209
          %212 = dma.hbm_to_vmem [thread:$0]  %s208, 128, %s210, [#allocation9]
        $region28: #{tpu_custom_call.1} parent=11 // pred_fallthru
          _
      $region12: #{tpu_custom_call.1} parent=5 // pred_fallthru
        _
      %p213 = scmp.lt.s32.totalorder %s19, 2
      // Predicated region
      $region29: #{tpu_custom_call.1} parent=5 // pred_check
        %p214 = pneg %p213
      $region30: #{tpu_custom_call.1} parent=5 // pred_check_branch
        %216 = sbr.rel (%p214) target = $region32
      $region31: #{tpu_custom_call.1} parent=5 // pred_region
        // Predicated region
        $region33: #{tpu_custom_call.1} parent=31 // pred_check
          %p217 = pneg %p39
        $region34: #{tpu_custom_call.1} parent=31 // pred_check_branch
          %219 = sbr.rel (%p217) target = $region36
        $region35: #{tpu_custom_call.1} parent=31 // pred_region
          %s220 = sand.u32 %s29, 1
          %s221 = scalar_lea.sflag [#allocation3], %s220
          %s222 = sand.u32 %s29, 1
          %s223 = smul.addr %s222, 8
          %s224 = scalar_lea.vmem [#allocation2], %s223
          %226 = vsyncadd %s221, 0
          %s227 = smul.addr %s19, 8
          %s228 = scalar_lea.hbm %s0, %s227
          %s230 = sshll.u32 %s228, 4
          %s231 = int_to_ptr.hbm [resolvable:$true] %s230
          %s232 = sshll.u32 %s224, 4
          %s233 = int_to_ptr.vmem [resolvable:$true] %s232
          %235 = dma.hbm_to_vmem [thread:$0]  %s231, 128, %s233, %s221
        $region36: #{tpu_custom_call.1} parent=31 // pred_fallthru
          _
      $region32: #{tpu_custom_call.1} parent=5 // pred_fallthru
        _
      %p236 = scmp.le.s32.totalorder 1, %s19
      %p237 = scmp.lt.s32.totalorder %s19, 3
      %p238 = pnand %p236, %p237
      %p239 = pneg %p238
      // Predicated region
      $region37: #{tpu_custom_call.1} parent=5 // pred_check
        _
      $region38: #{tpu_custom_call.1} parent=5 // pred_check_branch
        %241 = sbr.rel (%p238) target = $region40
      $region39: #{tpu_custom_call.1} parent=5 // pred_region
        %s242 = ssub.s32 %s19, 1
        %s243 = sand.u32 %s32, 1
        %s244 = scalar_lea.sflag [#allocation3], %s243
        %s245 = sand.u32 %s32, 1
        %s246 = smul.addr %s245, 8
        %s247 = scalar_lea.vmem [#allocation2], %s246
        // Predicated region
        $region41: #{tpu_custom_call.1} parent=39 // pred_check
          %p248 = pneg %p45
        $region42: #{tpu_custom_call.1} parent=39 // pred_check_branch
          %250 = sbr.rel (%p248) target = $region44
        $region43: #{tpu_custom_call.1} parent=39 // pred_region
          %252 = dma.done %s244, 128
        $region44: #{tpu_custom_call.1} parent=39 // pred_fallthru
          _
        // Predicated region
        $region45: #{tpu_custom_call.1} parent=39 // pred_check
          %p253 = pneg %p66
        $region46: #{tpu_custom_call.1} parent=39 // pred_check_branch
          %255 = sbr.rel (%p253) target = $region48
        $region47: #{tpu_custom_call.1} parent=39 // pred_region
          %257 = dma.done [#allocation6], 6144
        $region48: #{tpu_custom_call.1} parent=39 // pred_fallthru
          _
        // Predicated region
        $region49: #{tpu_custom_call.1} parent=39 // pred_check
          %p258 = pneg %p87
        $region50: #{tpu_custom_call.1} parent=39 // pred_check_branch
          %260 = sbr.rel (%p258) target = $region52
        $region51: #{tpu_custom_call.1} parent=39 // pred_region
          %262 = dma.done [#allocation6], 2048
        $region52: #{tpu_custom_call.1} parent=39 // pred_fallthru
          _
        // Predicated region
        $region53: #{tpu_custom_call.1} parent=39 // pred_check
          %p263 = pneg %p129
        $region54: #{tpu_custom_call.1} parent=39 // pred_check_branch
          %265 = sbr.rel (%p263) target = $region56
        $region55: #{tpu_custom_call.1} parent=39 // pred_region
          %267 = dma.done [#allocation9], 128
        $region56: #{tpu_custom_call.1} parent=39 // pred_fallthru
          _
        %s268 = sand.u32 %s32, 1
        %s269 = scalar_lea.sflag [#allocation3], %s268
        %s270 = sand.u32 %s32, 1
        %s271 = smul.addr %s270, 8
        %s272 = scalar_lea.vmem [#allocation2], %s271
        %p273 = pneg %p45
        %p274 = pneg %p42
        %p275 = pneg %p66
        %p276 = pneg %p63
        %p277 = pneg %p87
        %p278 = pneg %p84
        %p279 = pneg %p108
        %p280 = pneg %p105
        %p281 = pneg %p129
        %p282 = pneg %p126
        %p283 = pneg %p155
        %p284 = pneg %p152
        %s285 = sand.u32 %s142, 1
        %s286 = scalar_lea.sflag [#allocation4], %s285
        %s287 = sand.u32 %s142, 1
        %s288 = smul.addr %s287, 8
        %s289 = scalar_lea.vmem [#allocation10], %s288
        %v290 = vld [vmem:[%s247] sm:$0xff]
        %v291 = vld [vmem:[#allocation5] sm:$0xff]
        %v292 = vld [vmem:[#allocation5 + $0x8] sm:$0xff]
        %v293 = vld [vmem:[#allocation5 + $0x10] sm:$0xff]
        %v294 = vld [vmem:[#allocation5 + $0x18] sm:$0xff]
        %v295 = vld [vmem:[#allocation5 + $0x20] sm:$0xff]
        %v296 = vld [vmem:[#allocation5 + $0x28] sm:$0xff]
        %v297 = vld [vmem:[#allocation5 + $0x30] sm:$0xff]
        %v298 = vld [vmem:[#allocation5 + $0x38] sm:$0xff]
        %v299 = vld [vmem:[#allocation5 + $0x40] sm:$0xff]
        %v300 = vld [vmem:[#allocation5 + $0x48] sm:$0xff]
        %v301 = vld [vmem:[#allocation5 + $0x50] sm:$0xff]
        %v302 = vld [vmem:[#allocation5 + $0x58] sm:$0xff]
        %v303 = vld [vmem:[#allocation5 + $0x60] sm:$0xff]
        %v304 = vld [vmem:[#allocation5 + $0x68] sm:$0xff]
        %v305 = vld [vmem:[#allocation5 + $0x70] sm:$0xff]
        %v306 = vld [vmem:[#allocation5 + $0x78] sm:$0xff]
        %v307 = vld [vmem:[#allocation5 + $0x80] sm:$0xff]
        %v308 = vld [vmem:[#allocation5 + $0x88] sm:$0xff]
        %v309 = vld [vmem:[#allocation5 + $0x90] sm:$0xff]
        %v310 = vld [vmem:[#allocation5 + $0x98] sm:$0xff]
        %v311 = vld [vmem:[#allocation5 + $0xa0] sm:$0xff]
        %v312 = vld [vmem:[#allocation5 + $0xa8] sm:$0xff]
        %v313 = vld [vmem:[#allocation5 + $0xb0] sm:$0xff]
        %v314 = vld [vmem:[#allocation5 + $0xb8] sm:$0xff]
        %v315 = vld [vmem:[#allocation5 + $0xc0] sm:$0xff]
        %v316 = vld [vmem:[#allocation5 + $0xc8] sm:$0xff]
        %v317 = vld [vmem:[#allocation5 + $0xd0] sm:$0xff]
        %v318 = vld [vmem:[#allocation5 + $0xd8] sm:$0xff]
        %v319 = vld [vmem:[#allocation5 + $0xe0] sm:$0xff]
        %v320 = vld [vmem:[#allocation5 + $0xe8] sm:$0xff]
        %v321 = vld [vmem:[#allocation5 + $0xf0] sm:$0xff]
        %v322 = vld [vmem:[#allocation5 + $0xf8] sm:$0xff]
        %v323 = vld [vmem:[#allocation5 + $0x100] sm:$0xff]
        %v324 = vld [vmem:[#allocation5 + $0x108] sm:$0xff]
        %v325 = vld [vmem:[#allocation5 + $0x110] sm:$0xff]
        %v326 = vld [vmem:[#allocation5 + $0x118] sm:$0xff]
        %v327 = vld [vmem:[#allocation5 + $0x120] sm:$0xff]
        %v328 = vld [vmem:[#allocation5 + $0x128] sm:$0xff]
        %v329 = vld [vmem:[#allocation5 + $0x130] sm:$0xff]
        %v330 = vld [vmem:[#allocation5 + $0x138] sm:$0xff]
        %v331 = vld [vmem:[#allocation5 + $0x140] sm:$0xff]
        %v332 = vld [vmem:[#allocation5 + $0x148] sm:$0xff]
        %v333 = vld [vmem:[#allocation5 + $0x150] sm:$0xff]
        %v334 = vld [vmem:[#allocation5 + $0x158] sm:$0xff]
        %v335 = vld [vmem:[#allocation5 + $0x160] sm:$0xff]
        %v336 = vld [vmem:[#allocation5 + $0x168] sm:$0xff]
        %v337 = vld [vmem:[#allocation5 + $0x170] sm:$0xff]
        %v338 = vld [vmem:[#allocation5 + $0x178] sm:$0xff]
        %339 = vmatpush.msra.mxu0 %v336
        %340 = vmatpush.msra.mxu0 %v333
        %341 = vmatpush.msra.mxu0 %v330
        %342 = vmatpush.msra.mxu0 %v327
        %343 = vmatpush.msra.mxu0 %v324
        %344 = vmatpush.msra.mxu0 %v321
        %345 = vmatpush.msra.mxu0 %v318
        %346 = vmatpush.msra.mxu0 %v315
        %347 = vmatpush.msra.mxu0 %v312
        %348 = vmatpush.msra.mxu0 %v309
        %349 = vmatpush.msra.mxu0 %v306
        %350 = vmatpush.msra.mxu0 %v303
        %351 = vmatpush.msra.mxu0 %v300
        %352 = vmatpush.msra.mxu0 %v297
        %353 = vmatpush.msra.mxu0 %v294
        %354 = vmatpush.msra.mxu0 %v291
        %355 = vmatmul.f32.gmra.mxu0 %v290
        %v356 = vpop.f32.mrf.mxu0
        %v357 = vadd.f32 0.0, %v356
        %358 = vdwg.mxu0
        %359 = vmatpush.msra.mxu0 %v337
        %360 = vmatpush.msra.mxu0 %v334
        %361 = vmatpush.msra.mxu0 %v331
        %362 = vmatpush.msra.mxu0 %v328
        %363 = vmatpush.msra.mxu0 %v325
        %364 = vmatpush.msra.mxu0 %v322
        %365 = vmatpush.msra.mxu0 %v319
        %366 = vmatpush.msra.mxu0 %v316
        %367 = vmatpush.msra.mxu0 %v313
        %368 = vmatpush.msra.mxu0 %v310
        %369 = vmatpush.msra.mxu0 %v307
        %370 = vmatpush.msra.mxu0 %v304
        %371 = vmatpush.msra.mxu0 %v301
        %372 = vmatpush.msra.mxu0 %v298
        %373 = vmatpush.msra.mxu0 %v295
        %374 = vmatpush.msra.mxu0 %v292
        %375 = vmatmul.f32.gmra.mxu0 %v290
        %v376 = vpop.f32.mrf.mxu0
        %v377 = vadd.f32 0.0, %v376
        %378 = vdwg.mxu0
        %379 = vmatpush.msra.mxu0 %v338
        %380 = vmatpush.msra.mxu0 %v335
        %381 = vmatpush.msra.mxu0 %v332
        %382 = vmatpush.msra.mxu0 %v329
        %383 = vmatpush.msra.mxu0 %v326
        %384 = vmatpush.msra.mxu0 %v323
        %385 = vmatpush.msra.mxu0 %v320
        %386 = vmatpush.msra.mxu0 %v317
        %387 = vmatpush.msra.mxu0 %v314
        %388 = vmatpush.msra.mxu0 %v311
        %389 = vmatpush.msra.mxu0 %v308
        %390 = vmatpush.msra.mxu0 %v305
        %391 = vmatpush.msra.mxu0 %v302
        %392 = vmatpush.msra.mxu0 %v299
        %393 = vmatpush.msra.mxu0 %v296
        %394 = vmatpush.msra.mxu0 %v293
        %395 = vmatmul.f32.gmra.mxu0 %v290
        %v396 = vpop.f32.mrf.mxu0
        %v397 = vadd.f32 0.0, %v396
        %398 = vdwg.mxu0
        %v399 = vld [vmem:[#allocation8] sm:$0xff]
        %vm400 = vcmask 261120
        %v402 = vsel %vm400, %v357, 0
        %v405 = vsel %vm400, %v377, 0
        %407 = vmatpush.xpose.msra.mxu0 0.0
        %408 = vmatpush.xpose.msra.mxu0 0.0
        %409 = vmatpush.xpose.msra.mxu0 0.0
        %410 = vmatpush.xpose.msra.mxu0 0.0
        %411 = vmatpush.xpose.msra.mxu0 0.0
        %412 = vmatpush.xpose.msra.mxu0 0.0
        %413 = vmatpush.xpose.msra.mxu0 0.0
        %414 = vmatpush.xpose.msra.mxu0 0.0
        %415 = vmatpush.xpose.msra.mxu0 0.0
        %416 = vmatpush.xpose.msra.mxu0 0.0
        %417 = vmatpush.xpose.msra.mxu0 0.0
        %418 = vmatpush.xpose.msra.mxu0 0.0
        %419 = vmatpush.xpose.msra.mxu0 0.0
        %420 = vmatpush.xpose.msra.mxu0 0.0
        %421 = vmatpush.xpose.msra.mxu0 0.0
        %422 = vmatpush.xpose.msra.mxu0 %v405
        %423 = vmatmul.f32.gmra.mxu0 %v402
        %v424 = vpop.f32.mrf.mxu0
        %v425 = vadd.f32 %v399, %v424
        %426 = vdwg.mxu0
        %vm427 = vcmask 64512
        %v428 = vsel %vm427, %v425, -inf
        %429 = vmax.xlane.f32.xlu0 %v428
        %v430 = vpop.xlane.xlu0 %429
        %v431 = vsub.f32 %v425, %v430
        %v432 = vmul.f32 %v431, 1.442695
        %v433 = vpow.pop %v432
        %v434 = vsel %vm427, %v433, 0.0
        %435 = vadd.xlane.f32.xlu0 %v434
        %v436 = vpop.xlane.xlu0 %435
        %v438 = vsel %vm427, %v433, 0
        %440 = vmatpush.msra.mxu0 0.0
        %441 = vmatpush.msra.mxu0 0.0
        %442 = vmatpush.msra.mxu0 0.0
        %443 = vmatpush.msra.mxu0 0.0
        %444 = vmatpush.msra.mxu0 0.0
        %445 = vmatpush.msra.mxu0 0.0
        %446 = vmatpush.msra.mxu0 0.0
        %447 = vmatpush.msra.mxu0 0.0
        %448 = vmatpush.msra.mxu0 0.0
        %449 = vmatpush.msra.mxu0 0.0
        %450 = vmatpush.msra.mxu0 0.0
        %451 = vmatpush.msra.mxu0 0.0
        %452 = vmatpush.msra.mxu0 0.0
        %453 = vmatpush.msra.mxu0 0.0
        %454 = vmatpush.msra.mxu0 0.0
        %455 = vmatpush.msra.mxu0 %v397
        %456 = vmatmul.f32.gmra.mxu0 %v438
        %v457 = vpop.f32.mrf.mxu0
        %v458 = vadd.f32 0.0, %v457
        %459 = vdwg.mxu0
        %v460 = vrcp.pop %v436
        %v461 = vmul.f32 %v436, %v460
        %v462 = vsub.f32 1.0, %v461
        %v463 = vmul.f32 %v460, %v462
        %v464 = vadd.f32 %v460, %v463
        %vm465 = vweird.f32 %v436
        %vm466 = vweird.f32 %v460
        %vm467 = vmor %vm465, %vm466
        %v468 = vsel %vm467, %v460, %v464
        %v469 = vand.u32 2147483647, %v436
        %vm470 = vcmp.eq.f32.partialorder %v469, 8.507059e+37
        %v471 = vand.u32 %v436, 2147483648
        %v472 = vor.u32 1.1754944e-38, %v471
        %v473 = vsel %vm470, %v472, %v468
        %v474 = vmul.f32 %v458, %v473
        %475 = vrot.lane.b32.xlu0 %v357, 96
        %v476 = vpop.permute.xlu0 %475
        %477 = vrot.lane.b32.xlu0 %v377, 96
        %v478 = vpop.permute.xlu0 %477
        %v479 = vsel %vm400, %v476, 0
        %v481 = vsel %vm400, %v478, 0
        %483 = vmatpush.xpose.msra.mxu0 0.0
        %484 = vmatpush.xpose.msra.mxu0 0.0
        %485 = vmatpush.xpose.msra.mxu0 0.0
        %486 = vmatpush.xpose.msra.mxu0 0.0
        %487 = vmatpush.xpose.msra.mxu0 0.0
        %488 = vmatpush.xpose.msra.mxu0 0.0
        %489 = vmatpush.xpose.msra.mxu0 0.0
        %490 = vmatpush.xpose.msra.mxu0 0.0
        %491 = vmatpush.xpose.msra.mxu0 0.0
        %492 = vmatpush.xpose.msra.mxu0 0.0
        %493 = vmatpush.xpose.msra.mxu0 0.0
        %494 = vmatpush.xpose.msra.mxu0 0.0
        %495 = vmatpush.xpose.msra.mxu0 0.0
        %496 = vmatpush.xpose.msra.mxu0 0.0
        %497 = vmatpush.xpose.msra.mxu0 0.0
        %498 = vmatpush.xpose.msra.mxu0 %v481
        %499 = vmatmul.f32.gmra.mxu0 %v479
        %v500 = vpop.f32.mrf.mxu0
        %v501 = vadd.f32 %v399, %v500
        %502 = vdwg.mxu0
        %v503 = vsel %vm427, %v501, -inf
        %504 = vmax.xlane.f32.xlu0 %v503
        %v505 = vpop.xlane.xlu0 %504
        %v506 = vsub.f32 %v501, %v505
        %v507 = vmul.f32 %v506, 1.442695
        %v508 = vpow.pop %v507
        %v509 = vsel %vm427, %v508, 0.0
        %510 = vadd.xlane.f32.xlu0 %v509
        %v511 = vpop.xlane.xlu0 %510
        %513 = vrot.lane.b32.xlu0 %v397, 96
        %v514 = vpop.permute.xlu0 %513
        %v517 = vsel %vm427, %v508, 0
        %519 = vmatpush.msra.mxu0 0.0
        %520 = vmatpush.msra.mxu0 0.0
        %521 = vmatpush.msra.mxu0 0.0
        %522 = vmatpush.msra.mxu0 0.0
        %523 = vmatpush.msra.mxu0 0.0
        %524 = vmatpush.msra.mxu0 0.0
        %525 = vmatpush.msra.mxu0 0.0
        %526 = vmatpush.msra.mxu0 0.0
        %527 = vmatpush.msra.mxu0 0.0
        %528 = vmatpush.msra.mxu0 0.0
        %529 = vmatpush.msra.mxu0 0.0
        %530 = vmatpush.msra.mxu0 0.0
        %531 = vmatpush.msra.mxu0 0.0
        %532 = vmatpush.msra.mxu0 0.0
        %533 = vmatpush.msra.mxu0 0.0
        %534 = vmatpush.msra.mxu0 %v514
        %535 = vmatmul.f32.gmra.mxu0 %v517
        %v536 = vpop.f32.mrf.mxu0
        %v537 = vadd.f32 0.0, %v536
        %538 = vdwg.mxu0
        %v539 = vrcp.pop %v511
        %v540 = vmul.f32 %v511, %v539
        %v541 = vsub.f32 1.0, %v540
        %v542 = vmul.f32 %v539, %v541
        %v543 = vadd.f32 %v539, %v542
        %vm544 = vweird.f32 %v511
        %vm545 = vweird.f32 %v539
        %vm546 = vmor %vm544, %vm545
        %v547 = vsel %vm546, %v539, %v543
        %v548 = vand.u32 2147483647, %v511
        %vm549 = vcmp.eq.f32.partialorder %v548, 8.507059e+37
        %v550 = vand.u32 %v511, 2147483648
        %v551 = vor.u32 1.1754944e-38, %v550
        %v552 = vsel %vm549, %v551, %v547
        %v553 = vmul.f32 %v537, %v552
        %554 = vrot.lane.b32.xlu0 %v357, 64
        %v555 = vpop.permute.xlu0 %554
        %556 = vrot.lane.b32.xlu0 %v377, 64
        %v557 = vpop.permute.xlu0 %556
        %v558 = vsel %vm400, %v555, 0
        %v560 = vsel %vm400, %v557, 0
        %562 = vmatpush.xpose.msra.mxu0 0.0
        %563 = vmatpush.xpose.msra.mxu0 0.0
        %564 = vmatpush.xpose.msra.mxu0 0.0
        %565 = vmatpush.xpose.msra.mxu0 0.0
        %566 = vmatpush.xpose.msra.mxu0 0.0
        %567 = vmatpush.xpose.msra.mxu0 0.0
        %568 = vmatpush.xpose.msra.mxu0 0.0
        %569 = vmatpush.xpose.msra.mxu0 0.0
        %570 = vmatpush.xpose.msra.mxu0 0.0
        %571 = vmatpush.xpose.msra.mxu0 0.0
        %572 = vmatpush.xpose.msra.mxu0 0.0
        %573 = vmatpush.xpose.msra.mxu0 0.0
        %574 = vmatpush.xpose.msra.mxu0 0.0
        %575 = vmatpush.xpose.msra.mxu0 0.0
        %576 = vmatpush.xpose.msra.mxu0 0.0
        %577 = vmatpush.xpose.msra.mxu0 %v560
        %578 = vmatmul.f32.gmra.mxu0 %v558
        %v579 = vpop.f32.mrf.mxu0
        %v580 = vadd.f32 %v399, %v579
        %581 = vdwg.mxu0
        %v582 = vsel %vm427, %v580, -inf
        %583 = vmax.xlane.f32.xlu0 %v582
        %v584 = vpop.xlane.xlu0 %583
        %v585 = vsub.f32 %v580, %v584
        %v586 = vmul.f32 %v585, 1.442695
        %v587 = vpow.pop %v586
        %v588 = vsel %vm427, %v587, 0.0
        %589 = vadd.xlane.f32.xlu0 %v588
        %v590 = vpop.xlane.xlu0 %589
        %591 = vrot.lane.b32.xlu0 %v397, 64
        %v592 = vpop.permute.xlu0 %591
        %v595 = vsel %vm427, %v587, 0
        %597 = vmatpush.msra.mxu0 0.0
        %598 = vmatpush.msra.mxu0 0.0
        %599 = vmatpush.msra.mxu0 0.0
        %600 = vmatpush.msra.mxu0 0.0
        %601 = vmatpush.msra.mxu0 0.0
        %602 = vmatpush.msra.mxu0 0.0
        %603 = vmatpush.msra.mxu0 0.0
        %604 = vmatpush.msra.mxu0 0.0
        %605 = vmatpush.msra.mxu0 0.0
        %606 = vmatpush.msra.mxu0 0.0
        %607 = vmatpush.msra.mxu0 0.0
        %608 = vmatpush.msra.mxu0 0.0
        %609 = vmatpush.msra.mxu0 0.0
        %610 = vmatpush.msra.mxu0 0.0
        %611 = vmatpush.msra.mxu0 0.0
        %612 = vmatpush.msra.mxu0 %v592
        %613 = vmatmul.f32.gmra.mxu0 %v595
        %v614 = vpop.f32.mrf.mxu0
        %v615 = vadd.f32 0.0, %v614
        %616 = vdwg.mxu0
        %v617 = vrcp.pop %v590
        %v618 = vmul.f32 %v590, %v617
        %v619 = vsub.f32 1.0, %v618
        %v620 = vmul.f32 %v617, %v619
        %v621 = vadd.f32 %v617, %v620
        %vm622 = vweird.f32 %v590
        %vm623 = vweird.f32 %v617
        %vm624 = vmor %vm622, %vm623
        %v625 = vsel %vm624, %v617, %v621
        %v626 = vand.u32 2147483647, %v590
        %vm627 = vcmp.eq.f32.partialorder %v626, 8.507059e+37
        %v628 = vand.u32 %v590, 2147483648
        %v629 = vor.u32 1.1754944e-38, %v628
        %v630 = vsel %vm627, %v629, %v625
        %v631 = vmul.f32 %v615, %v630
        %632 = vrot.lane.b32.xlu0 %v357, 32
        %v633 = vpop.permute.xlu0 %632
        %634 = vrot.lane.b32.xlu0 %v377, 32
        %v635 = vpop.permute.xlu0 %634
        %v636 = vsel %vm400, %v633, 0
        %v638 = vsel %vm400, %v635, 0
        %640 = vmatpush.xpose.msra.mxu0 0.0
        %641 = vmatpush.xpose.msra.mxu0 0.0
        %642 = vmatpush.xpose.msra.mxu0 0.0
        %643 = vmatpush.xpose.msra.mxu0 0.0
        %644 = vmatpush.xpose.msra.mxu0 0.0
        %645 = vmatpush.xpose.msra.mxu0 0.0
        %646 = vmatpush.xpose.msra.mxu0 0.0
        %647 = vmatpush.xpose.msra.mxu0 0.0
        %648 = vmatpush.xpose.msra.mxu0 0.0
        %649 = vmatpush.xpose.msra.mxu0 0.0
        %650 = vmatpush.xpose.msra.mxu0 0.0
        %651 = vmatpush.xpose.msra.mxu0 0.0
        %652 = vmatpush.xpose.msra.mxu0 0.0
        %653 = vmatpush.xpose.msra.mxu0 0.0
        %654 = vmatpush.xpose.msra.mxu0 0.0
        %655 = vmatpush.xpose.msra.mxu0 %v638
        %656 = vmatmul.f32.gmra.mxu0 %v636
        %v657 = vpop.f32.mrf.mxu0
        %v658 = vadd.f32 %v399, %v657
        %659 = vdwg.mxu0
        %v660 = vsel %vm427, %v658, -inf
        %661 = vmax.xlane.f32.xlu0 %v660
        %v662 = vpop.xlane.xlu0 %661
        %v663 = vsub.f32 %v658, %v662
        %v664 = vmul.f32 %v663, 1.442695
        %v665 = vpow.pop %v664
        %v666 = vsel %vm427, %v665, 0.0
        %667 = vadd.xlane.f32.xlu0 %v666
        %v668 = vpop.xlane.xlu0 %667
        %669 = vrot.lane.b32.xlu0 %v397, 32
        %v670 = vpop.permute.xlu0 %669
        %v673 = vsel %vm427, %v665, 0
        %675 = vmatpush.msra.mxu0 0.0
        %676 = vmatpush.msra.mxu0 0.0
        %677 = vmatpush.msra.mxu0 0.0
        %678 = vmatpush.msra.mxu0 0.0
        %679 = vmatpush.msra.mxu0 0.0
        %680 = vmatpush.msra.mxu0 0.0
        %681 = vmatpush.msra.mxu0 0.0
        %682 = vmatpush.msra.mxu0 0.0
        %683 = vmatpush.msra.mxu0 0.0
        %684 = vmatpush.msra.mxu0 0.0
        %685 = vmatpush.msra.mxu0 0.0
        %686 = vmatpush.msra.mxu0 0.0
        %687 = vmatpush.msra.mxu0 0.0
        %688 = vmatpush.msra.mxu0 0.0
        %689 = vmatpush.msra.mxu0 0.0
        %690 = vmatpush.msra.mxu0 %v670
        %691 = vmatmul.f32.gmra.mxu0 %v673
        %v692 = vpop.f32.mrf.mxu0
        %v693 = vadd.f32 0.0, %v692
        %694 = vdwg.mxu0
        %v695 = vrcp.pop %v668
        %v696 = vmul.f32 %v668, %v695
        %v697 = vsub.f32 1.0, %v696
        %v698 = vmul.f32 %v695, %v697
        %v699 = vadd.f32 %v695, %v698
        %vm700 = vweird.f32 %v668
        %vm701 = vweird.f32 %v695
        %vm702 = vmor %vm700, %vm701
        %v703 = vsel %vm702, %v695, %v699
        %v704 = vand.u32 2147483647, %v668
        %vm705 = vcmp.eq.f32.partialorder %v704, 8.507059e+37
        %v706 = vand.u32 %v668, 2147483648
        %v707 = vor.u32 1.1754944e-38, %v706
        %v708 = vsel %vm705, %v707, %v703
        %v709 = vmul.f32 %v693, %v708
        %711 = vrot.lane.b32.xlu0 %v553, 32
        %v712 = vpop.permute.xlu0 %711
        %715 = vrot.lane.b32.xlu0 %v631, 64
        %v716 = vpop.permute.xlu0 %715
        %719 = vrot.lane.b32.xlu0 %v709, 96
        %v720 = vpop.permute.xlu0 %719
        %v722 = vsel %vm400, %v474, %v712
        %vm723 = vcmask 523264
        %v724 = vsel %vm723, %v722, %v716
        %vm725 = vcmask 785408
        %v726 = vsel %vm725, %v724, %v720
        %v727 = vld [vmem:[#allocation7] sm:$0xff]
        %v728 = vld [vmem:[#allocation7 + $0x8] sm:$0xff]
        %v729 = vld [vmem:[#allocation7 + $0x10] sm:$0xff]
        %v730 = vld [vmem:[#allocation7 + $0x18] sm:$0xff]
        %v731 = vld [vmem:[#allocation7 + $0x20] sm:$0xff]
        %v732 = vld [vmem:[#allocation7 + $0x28] sm:$0xff]
        %v733 = vld [vmem:[#allocation7 + $0x30] sm:$0xff]
        %v734 = vld [vmem:[#allocation7 + $0x38] sm:$0xff]
        %v735 = vld [vmem:[#allocation7 + $0x40] sm:$0xff]
        %v736 = vld [vmem:[#allocation7 + $0x48] sm:$0xff]
        %v737 = vld [vmem:[#allocation7 + $0x50] sm:$0xff]
        %v738 = vld [vmem:[#allocation7 + $0x58] sm:$0xff]
        %v739 = vld [vmem:[#allocation7 + $0x60] sm:$0xff]
        %v740 = vld [vmem:[#allocation7 + $0x68] sm:$0xff]
        %v741 = vld [vmem:[#allocation7 + $0x70] sm:$0xff]
        %v742 = vld [vmem:[#allocation7 + $0x78] sm:$0xff]
        %v743 = vld [vmem:[%s3] sm:$0x1]
        %v745 = vperm.slane %v743, 0
        %747 = vmatpush.msra.mxu0 %v742
        %748 = vmatpush.msra.mxu0 %v741
        %749 = vmatpush.msra.mxu0 %v740
        %750 = vmatpush.msra.mxu0 %v739
        %751 = vmatpush.msra.mxu0 %v738
        %752 = vmatpush.msra.mxu0 %v737
        %753 = vmatpush.msra.mxu0 %v736
        %754 = vmatpush.msra.mxu0 %v735
        %755 = vmatpush.msra.mxu0 %v734
        %756 = vmatpush.msra.mxu0 %v733
        %757 = vmatpush.msra.mxu0 %v732
        %758 = vmatpush.msra.mxu0 %v731
        %759 = vmatpush.msra.mxu0 %v730
        %760 = vmatpush.msra.mxu0 %v729
        %761 = vmatpush.msra.mxu0 %v728
        %762 = vmatpush.msra.mxu0 %v727
        %763 = vmatmul.f32.gmra.mxu0 %v726
        %v764 = vpop.f32.mrf.mxu0
        %v765 = vadd.f32 %v745, %v764
        %766 = vdwg.mxu0
        %767 = vst [vmem:[%s289] sm:$0xff] %v765
        %s768 = sand.u32 %s142, 1
        %s769 = scalar_lea.sflag [#allocation4], %s768
        %s770 = sand.u32 %s142, 1
        %s771 = smul.addr %s770, 8
        %s772 = scalar_lea.vmem [#allocation10], %s771
        // Predicated region
        $region57: #{tpu_custom_call.1} parent=39 // pred_check
          %p773 = pneg %p152
        $region58: #{tpu_custom_call.1} parent=39 // pred_check_branch
          %775 = sbr.rel (%p773) target = $region60
        $region59: #{tpu_custom_call.1} parent=39 // pred_region
          %777 = vsyncadd %s769, 0
          %s778 = smul.addr %s24, 8
          %s779 = scalar_lea.hbm %s5, %s778
          %s781 = sshll.u32 %s772, 4
          %s782 = int_to_ptr.vmem [resolvable:$true] %s781
          %s783 = sshll.u32 %s779, 4
          %s784 = int_to_ptr.hbm [resolvable:$true] %s783
          %786 = dma.vmem_to_hbm [thread:$0]  %s782, 128, %s784, %s769
        $region60: #{tpu_custom_call.1} parent=39 // pred_fallthru
          _
      $region40: #{tpu_custom_call.1} parent=5 // pred_fallthru
        _
      %p787 = scmp.le.s32.totalorder 2, %s19
      // Predicated region
      $region61: #{tpu_custom_call.1} parent=5 // pred_check
        %p788 = pneg %p787
      $region62: #{tpu_custom_call.1} parent=5 // pred_check_branch
        %790 = sbr.rel (%p788) target = $region64
      $region63: #{tpu_custom_call.1} parent=5 // pred_region
        %s791 = ssub.s32 %s19, 2
        // Predicated region
        $region65: #{tpu_custom_call.1} parent=63 // pred_check
          %p792 = pneg %p158
        $region66: #{tpu_custom_call.1} parent=63 // pred_check_branch
          %794 = sbr.rel (%p792) target = $region68
        $region67: #{tpu_custom_call.1} parent=63 // pred_region
          %s795 = sand.u32 %s143, 1
          %s796 = scalar_lea.sflag [#allocation4], %s795
          %s797 = sand.u32 %s143, 1
          %s798 = smul.addr %s797, 8
          %s799 = scalar_lea.vmem [#allocation10], %s798
          %801 = dma.done %s796, 128
        $region68: #{tpu_custom_call.1} parent=63 // pred_fallthru
          _
      $region64: #{tpu_custom_call.1} parent=5 // pred_fallthru
        _
    $region6: #{tpu_custom_call.1} parent=1 // loop_footer
      %s23 = sadd.s32 1, %s19
    $region7: #{tpu_custom_call.1} parent=1 // loop_footer_branch
      %18 = sbr.rel target = $region3
    $region8: #{tpu_custom_call.1} parent=1 // loop_exit
      _
    %802 = vsyncpa [#allocation3], 1
    %s803 = scalar_lea.sflag [#allocation3], 1
    %804 = vsyncpa %s803, 1
    %805 = vsyncpa [#allocation6], 1
    %806 = vsyncpa [#allocation9], 1
    %807 = vsyncpa [#allocation4], 1
    %s808 = scalar_lea.sflag [#allocation4], 1
    %809 = vsyncpa %s808, 1

</llo_original>
